<compile_context>
chip_gen: v5e
topology: v5e:2x2
jax: 0.10.0
libtpu: 0.0.40
codegen_flags: <defaults>
</compile_context>

<pallas_src>
import jax
import jax.numpy as jnp
from jax.experimental import pallas as pl
from jax.experimental.pallas import tpu as pltpu


def _identity_kernel(x_ref, o_ref):
    # Pure pass-through on the current VMEM tile (vld/vst fully hidden by DMA).
    o_ref[...] = x_ref[...]


def _sublane_pack(dtype):
    # Packed sublane granularity: 8 rows for 32-bit, 16 for 16-bit, 32 for 8-bit.
    itemsize = jnp.dtype(dtype).itemsize
    return max(8, 32 // max(itemsize, 1))


# Below this size the fixed kernel-dispatch / pipeline-ramp cost dominates the
# sub-microsecond copy itself, so a plain return (or XLA copy) is cheaper.
_SMALL_TENSOR_BYTES = 1 << 20  # 1 MiB

# ~2 MiB per tile: past the ~85% HBM-roofline knee on v5e/v6e, and with the
# default double-buffering of in+out blocks (4x tile = 8 MiB) it stays inside
# even v5e's 16 MiB default scoped-VMEM limit.
_TILE_BYTES = 2 * 1024 * 1024


def identity(x, *, materialize=False, donate=False, force_kernel=False):
    """Identity forward.

    Default (`materialize=False`): returns `x` itself -- zero HBM traffic,
    identical to the PyTorch module's `return x`.

    `materialize=True`: returns an equal tensor produced by a Pallas copy
    kernel (fresh buffer unless `donate=True`, in which case the input buffer
    is aliased as the output).
    """
    if not materialize:
        return x

    orig_shape = x.shape
    dtype = x.dtype
    n = x.size
    itemsize = jnp.dtype(dtype).itemsize
    nbytes = n * itemsize
    sub = _sublane_pack(dtype)

    if nbytes < _SMALL_TENSOR_BYTES and not force_kernel:
        # Overhead-bound regime: let XLA do the (tiny) copy.
        return jnp.asarray(x).reshape(orig_shape) + jnp.zeros((), dtype=dtype)

    # Pick the widest lane-dense column count (multiple of 128) that divides n
    # and leaves a sublane-aligned row count.  No padding, no extra HBM passes.
    cols = None
    for c in (2048, 1024, 512, 256, 128):
        if n % c == 0 and (n // c) % sub == 0:
            cols = c
            break
    if cols is None:
        # Not (sub, 128)-tileable without padding; identity needs no compute,
        # so the cheapest correct answer is the input itself.
        return x

    rows = n // cols

    # ~2 MiB tile over the row axis, rounded to the packed-sublane count.
    target_rows = max(sub, _TILE_BYTES // (cols * itemsize))
    target_rows = max(sub, (target_rows // sub) * sub)
    tile_rows = min(rows, target_rows)
    tile_rows = max(sub, (tile_rows // sub) * sub)

    # Guarantee a multi-step grid when rows allow it: a single-step grid leaves
    # one v7x TensorCore (and its DMA engines) idle.  No-op on v5e/v6e shapes.
    if pl.cdiv(rows, tile_rows) == 1 and rows >= 2 * sub:
        tile_rows = max(sub, ((rows // 2) // sub) * sub)

    grid = pl.cdiv(rows, tile_rows)  # Pallas masks the partial tail block.

    x2d = x.reshape(rows, cols)

    call = pl.pallas_call(
        _identity_kernel,
        out_shape=jax.ShapeDtypeStruct((rows, cols), dtype),
        grid_spec=pltpu.PrefetchScalarGridSpec(
            num_scalar_prefetch=0,
            grid=(grid,),
            in_specs=[pl.BlockSpec((tile_rows, cols), lambda i: (i, 0))],
            out_specs=pl.BlockSpec((tile_rows, cols), lambda i: (i, 0)),
        ),
        compiler_params=pltpu.CompilerParams(
            dimension_semantics=("parallel",),
        ),
        # Only alias when the caller declares the input donated; aliasing a
        # non-donated input makes XLA insert a defensive full copy first.
        input_output_aliases=({0: 0} if donate else {}),
        # Advisory: zero flops, pure memory traffic (read + write).
        cost_estimate=pl.CostEstimate(
            flops=0, transcendentals=0, bytes_accessed=2 * nbytes
        ),
    )

    out2d = call(x2d)
    return out2d.reshape(orig_shape)


if __name__ == "__main__":
    key = jax.random.PRNGKey(0)
    x = jax.random.normal(key, (2, 4, 16, 16), dtype=jnp.float32)  # NCHW

    # Default path: semantic identity, zero traffic.
    y0 = identity(x)
    assert y0 is x

    # Kernel path: force the Pallas copy even at this small test shape so the
    # kernel is exercised once on hardware.
    y = identity(x, materialize=True, force_kernel=True)
    y = jax.block_until_ready(y)
    assert y.shape == x.shape and y.dtype == x.dtype
    assert bool(jnp.all(y == x))
    print("KERNEL_OK")
</pallas_src>

<mosaic_0001>
module attributes {stable_mosaic.version = 11 : i64} {
  func.func @_identity_kernel(%arg0: i32, %arg1: memref<8x256xf32, #tpu.memory_space<vmem>>, %arg2: memref<8x256xf32, #tpu.memory_space<vmem>>) attributes {dimension_semantics = [#tpu.dimension_semantics<parallel>], iteration_bounds = array<i64: 1>, scalar_prefetch = 0 : i64, scratch_operands = 0 : i64, tpu.core_type = #tpu.core_type<tc>, window_params = [{transform_indices = @transform_0, window_bounds = array<i64: 8, 256>}, {transform_indices = @transform_1, window_bounds = array<i64: 8, 256>}]} {
    %c0 = arith.constant 0 : index
    %c0_0 = arith.constant 0 : index
    %0 = vector.load %arg1[%c0, %c0_0] : memref<8x256xf32, #tpu.memory_space<vmem>>, vector<8x256xf32>
    %c0_1 = arith.constant 0 : index
    %c0_2 = arith.constant 0 : index
    %1 = vector.load %arg2[%c0_1, %c0_2] : memref<8x256xf32, #tpu.memory_space<vmem>>, vector<8x256xf32>
    tpu.vector_store %arg2[%c0_1, %c0_2], %0 {strides = array<i32>} : memref<8x256xf32, #tpu.memory_space<vmem>>, vector<8x256xf32>,
    return
  }
  func.func @transform_0(%arg0: i32) -> (i32, i32) {
    %c0_i32 = arith.constant 0 : i32
    %c0_i32_0 = arith.constant 0 : i32
    return %arg0, %c0_i32 : i32, i32
  }
  func.func @transform_1(%arg0: i32) -> (i32, i32) {
    %c0_i32 = arith.constant 0 : i32
    %c0_i32_0 = arith.constant 0 : i32
    return %arg0, %c0_i32 : i32, i32
  }
}

</mosaic_0001>

<llo_original>
// kernel: tpu_custom_call.1
$region0: #{tpu_custom_call.1}
  #allocation0 [shape = 'u32[]', space=smem, size = 0x4, offset = 0x4, fixed_abs, tag = 'smem constant byte address 0x4 - core index']
  #allocation1 [shape = 'u32[72,128]{1,0:T(1,128)}', space=vmem, size = 0x9000, scoped, tag = 'internal scratch']
  %s0 = inlined_call_operand.hbm [shape: f32[8,256], index: 0, kind: input, shape index: {}]
  %s1 = inlined_call_operand.hbm [shape: f32[8,256], index: 1, kind: output, shape index: {}]
  %s2 = sld [smem:[#allocation0]]
  $region18: #{tpu_custom_call.1} parent=0
    _
  %s4 = ssub.s32 1, %s2
  %s5 = scalar_select 0, %s4, %s2
  $region1: #{tpu_custom_call.1} parent=0
    #allocation2 [shape = 'u8[8192]{0}', space=vmem, size = 0x2000, scoped, tag = 'input window, operand 0, single buffered']
    #allocation3 [shape = 's32[1]{0}', space=sflag, size = 0x4, scoped, tag = 'scoped memory for tpu_custom_call.1']
    #allocation4 [shape = 's32[1]{0}', space=sflag, size = 0x4, scoped, tag = 'scoped memory for tpu_custom_call.1']
    #allocation5 [shape = 'u8[8192]{0}', space=vmem, size = 0x2000, scoped, tag = 'output window, operand 0, single buffered']
    %6 = vsyncpa [#allocation3], 0
    %7 = vsyncpa [#allocation4], 0
    // Predicated region
    $region2: #{tpu_custom_call.1} parent=1 // pred_check
      _
    $region3: #{tpu_custom_call.1} parent=1 // pred_check_branch
      %9 = sbr.rel (0) target = $region5
    $region4: #{tpu_custom_call.1} parent=1 // pred_region
      %11 = vsyncadd [#allocation3], 0
      %s13 = sshll.u32 %s0, 4
      %s14 = int_to_ptr.hbm [resolvable:$true] %s13
      %s15 = sshll.u32 [#allocation2], 4
      %s16 = int_to_ptr.vmem [resolvable:$true] %s15
      %18 = dma.hbm_to_vmem [thread:$0]  %s14, 256, %s16, [#allocation3]
    $region5: #{tpu_custom_call.1} parent=1 // pred_fallthru
      _
    // Predicated region
    $region6: #{tpu_custom_call.1} parent=1 // pred_check
      _
    $region7: #{tpu_custom_call.1} parent=1 // pred_check_branch
      %20 = sbr.rel (0) target = $region9
    $region8: #{tpu_custom_call.1} parent=1 // pred_region
      %22 = dma.done [#allocation3], 256
    $region9: #{tpu_custom_call.1} parent=1 // pred_fallthru
      _
    %v23 = vld [vmem:[#allocation2] sm:$0xff]
    %v24 = vld [vmem:[#allocation2 + $0x8] sm:$0xff]
    %25 = vst [vmem:[#allocation5] sm:$0xff] %v23
    %26 = vst [vmem:[#allocation5 + $0x8] sm:$0xff] %v24
    // Predicated region
    $region10: #{tpu_custom_call.1} parent=1 // pred_check
      _
    $region11: #{tpu_custom_call.1} parent=1 // pred_check_branch
      %28 = sbr.rel (0) target = $region13
    $region12: #{tpu_custom_call.1} parent=1 // pred_region
      %30 = vsyncadd [#allocation4], 0
      %s32 = sshll.u32 [#allocation5], 4
      %s33 = int_to_ptr.vmem [resolvable:$true] %s32
      %s34 = sshll.u32 %s1, 4
      %s35 = int_to_ptr.hbm [resolvable:$true] %s34
      %37 = dma.vmem_to_hbm [thread:$0]  %s33, 256, %s35, [#allocation4]
    $region13: #{tpu_custom_call.1} parent=1 // pred_fallthru
      _
    // Predicated region
    $region14: #{tpu_custom_call.1} parent=1 // pred_check
      _
    $region15: #{tpu_custom_call.1} parent=1 // pred_check_branch
      %39 = sbr.rel (0) target = $region17
    $region16: #{tpu_custom_call.1} parent=1 // pred_region
      %41 = dma.done [#allocation4], 256
    $region17: #{tpu_custom_call.1} parent=1 // pred_fallthru
      _
    %42 = vsyncpa [#allocation3], 1
    %43 = vsyncpa [#allocation4], 1

</llo_original>
